<compile_context>
chip_gen: v6e
topology: v6e:2x2x1
jax: 0.10.0
libtpu: 0.0.40
codegen_flags: <defaults>
</compile_context>

<pallas_src>
import functools

import jax
import jax.numpy as jnp
from jax import lax
from jax.experimental import pallas as pl
from jax.experimental.pallas import tpu as pltpu


def _attention_kernel(*refs, scale, head_dim, has_qkv_bias):
    """One grid program == (batch sample b, head h).

    x_ref     : (1, N, C)        VMEM (resident across the head axis)
    wqkv_ref  : (1, C, 3*hd)     VMEM (per-head QKV weight tile)
    bqkv_ref  : (1, 1, 3*hd)     VMEM (optional, per-head QKV bias tile)
    wproj_ref : (1, hd, C)       VMEM (per-head projection rows)
    bproj_ref : (1, C)           VMEM (resident)
    o_ref     : (1, N, C)        VMEM (resident across head axis, written at last h)
    attn_ref  : (1, 1, N, N)     VMEM (written back every head step)
    acc_ref   : (N, C) f32       VMEM scratch (projection accumulator)
    """
    if has_qkv_bias:
        (x_ref, wqkv_ref, bqkv_ref, wproj_ref, bproj_ref,
         o_ref, attn_ref, acc_ref) = refs
    else:
        (x_ref, wqkv_ref, wproj_ref, bproj_ref,
         o_ref, attn_ref, acc_ref) = refs
        bqkv_ref = None

    h = pl.program_id(1)
    last_h = pl.num_programs(1) - 1
    hd = head_dim
    dt = x_ref.dtype

    x = x_ref[0]                # (N, C)   input dtype -> MXU at native rate
    wqkv_h = wqkv_ref[0]        # (C, 3*hd)

    # Fused per-head QKV projection on the MXU, f32 accumulation only.
    qkv_h = jnp.dot(x, wqkv_h, preferred_element_type=jnp.float32)   # (N, 3*hd) f32
    if bqkv_ref is not None:
        qkv_h = qkv_h + bqkv_ref[0].astype(jnp.float32)

    # Static slices of the per-head qkv value; scale folded into q.
    q = (qkv_h[:, :hd] * scale).astype(dt)          # (N, hd)
    k = qkv_h[:, hd:2 * hd].astype(dt)              # (N, hd)
    v = qkv_h[:, 2 * hd:].astype(dt)                # (N, hd)

    # q @ k^T (contract last dims; no explicit transpose), f32 accumulation.
    s = lax.dot_general(q, k, (((1,), (1,)), ((), ())),
                        preferred_element_type=jnp.float32)          # (N, N) f32

    # Numerically stable softmax; reciprocal on the EUP slot.
    s = s - jnp.max(s, axis=-1, keepdims=True)
    e = jnp.exp(s)
    attn = e * pl.reciprocal(jnp.sum(e, axis=-1, keepdims=True), approx=True)

    attn_ref[0, 0] = attn.astype(attn_ref.dtype)

    # (attn @ v) and this head's rows of the output projection.
    o_h = jnp.dot(attn.astype(dt), v, preferred_element_type=jnp.float32)    # (N, hd)
    proj_h = jnp.dot(o_h.astype(dt), wproj_ref[0],
                     preferred_element_type=jnp.float32)                     # (N, C)

    @pl.when(h == 0)
    def _():
        acc_ref[...] = jnp.zeros_like(acc_ref)

    acc_ref[...] += proj_h

    @pl.when(h == last_h)
    def _():
        out = acc_ref[...] + bproj_ref[...].astype(jnp.float32)
        o_ref[0] = out.astype(o_ref.dtype)


def attention_pallas(x, w_qkv, b_qkv, w_proj, b_proj, *, num_heads, qk_scale=None):
    """Pallas Attention forward. Returns (out, attn) like the PyTorch module.

    w_qkv: (C, 3C) so that qkv = x @ w_qkv (+ b_qkv); w_proj: (C, C); b_proj: (C,).
    b_qkv may be None (qkv_bias=False, the module default).
    """
    B, N, C = x.shape
    H = num_heads
    assert C % H == 0, "dim must be divisible by num_heads"
    hd = C // H
    scale = float(qk_scale) if qk_scale is not None else hd ** (-0.5)

    # Host-side one-time per-head weight layouts (contiguous q|k|v columns per head).
    wqkv_h = w_qkv.reshape(C, 3, H, hd).transpose(2, 0, 1, 3).reshape(H, C, 3 * hd)
    wproj_h = w_proj.reshape(H, hd, C)
    bproj2 = b_proj.reshape(1, C)

    has_qkv_bias = b_qkv is not None

    args = [x, wqkv_h]
    in_specs = [
        pl.BlockSpec((1, N, C), lambda b, h: (b, 0, 0)),        # x (resident over h)
        pl.BlockSpec((1, C, 3 * hd), lambda b, h: (h, 0, 0)),   # per-head Wqkv
    ]
    if has_qkv_bias:
        bqkv_h = b_qkv.reshape(3, H, hd).transpose(1, 0, 2).reshape(H, 1, 3 * hd)
        args.append(bqkv_h)
        in_specs.append(pl.BlockSpec((1, 1, 3 * hd), lambda b, h: (h, 0, 0)))
    args += [wproj_h, bproj2]
    in_specs += [
        pl.BlockSpec((1, hd, C), lambda b, h: (h, 0, 0)),       # per-head Wproj rows
        pl.BlockSpec((1, C), lambda b, h: (0, 0)),              # bproj (resident)
    ]

    kernel = functools.partial(_attention_kernel, scale=scale, head_dim=hd,
                               has_qkv_bias=has_qkv_bias)

    out, attn = pl.pallas_call(
        kernel,
        grid=(B, H),
        in_specs=in_specs,
        out_specs=[
            pl.BlockSpec((1, N, C), lambda b, h: (b, 0, 0)),        # out (written at last h)
            pl.BlockSpec((1, 1, N, N), lambda b, h: (b, h, 0, 0)),  # attn (per head)
        ],
        out_shape=(
            jax.ShapeDtypeStruct((B, N, C), x.dtype),
            jax.ShapeDtypeStruct((B, H, N, N), x.dtype),
        ),
        scratch_shapes=[pltpu.VMEM((N, C), jnp.float32)],
        compiler_params=pltpu.CompilerParams(
            dimension_semantics=("parallel", "arbitrary"),
            vmem_limit_bytes=32 * 1024 * 1024,
        ),
    )(*args)

    return out, attn


def attention_reference(x, w_qkv, b_qkv, w_proj, b_proj, *, num_heads, qk_scale=None):
    """Pure-JAX reference mirroring the PyTorch module."""
    B, N, C = x.shape
    H = num_heads
    hd = C // H
    scale = qk_scale if qk_scale is not None else hd ** (-0.5)
    if b_qkv is None:
        b_qkv = jnp.zeros((3 * C,), x.dtype)
    qkv = x @ w_qkv + b_qkv
    qkv = qkv.reshape(B, N, 3, H, hd).transpose(2, 0, 3, 1, 4)
    q, k, v = qkv[0], qkv[1], qkv[2]
    attn = jnp.einsum("bhnd,bhmd->bhnm", q, k) * scale
    attn = jax.nn.softmax(attn, axis=-1)
    out = jnp.einsum("bhnm,bhmd->bhnd", attn, v)
    out = out.transpose(0, 2, 1, 3).reshape(B, N, C)
    out = out @ w_proj + b_proj
    return out, attn


if __name__ == "__main__":
    key = jax.random.PRNGKey(0)
    B, N, C, H = 2, 8, 32, 8   # batch=2, seq=8, hidden=32, 8 heads (head_dim=4)

    k1, k2, k3, k4, k5 = jax.random.split(key, 5)
    x = jax.random.normal(k1, (B, N, C), dtype=jnp.float32)
    w_qkv = jax.random.normal(k2, (C, 3 * C), dtype=jnp.float32) * 0.1
    b_qkv = jax.random.normal(k5, (3 * C,), dtype=jnp.float32) * 0.1
    w_proj = jax.random.normal(k3, (C, C), dtype=jnp.float32) * 0.1
    b_proj = jax.random.normal(k4, (C,), dtype=jnp.float32) * 0.1

    ok = True
    # Exercise both qkv_bias=True (DINO ViTs) and the module default qkv_bias=False.
    for bias in (b_qkv, None):
        out, attn = attention_pallas(x, w_qkv, bias, w_proj, b_proj, num_heads=H)
        out, attn = jax.block_until_ready((out, attn))
        out_exp, attn_exp = attention_reference(
            x, w_qkv, bias, w_proj, b_proj, num_heads=H)

        # Tolerances account for the EUP approximate reciprocal in softmax.
        ok = ok and bool(jnp.allclose(out, out_exp, rtol=1e-2, atol=1e-2))
        ok = ok and bool(jnp.allclose(attn, attn_exp, rtol=1e-2, atol=1e-2))
        ok = ok and bool(jnp.allclose(jnp.sum(attn, axis=-1), 1.0, atol=1e-2))

    if ok:
        print("KERNEL_OK")
    else:
        raise SystemExit("Attention kernel output did not match the reference")
</pallas_src>

<mosaic_0001>
module attributes {stable_mosaic.version = 11 : i64} {
  func.func @_attention_kernel(%arg0: i32, %arg1: i32, %arg2: memref<1x8x32xf32, #tpu.memory_space<vmem>>, %arg3: memref<1x32x12xf32, #tpu.memory_space<vmem>>, %arg4: memref<1x1x12xf32, #tpu.memory_space<vmem>>, %arg5: memref<1x4x32xf32, #tpu.memory_space<vmem>>, %arg6: memref<1x32xf32, #tpu.memory_space<vmem>>, %arg7: memref<1x8x32xf32, #tpu.memory_space<vmem>>, %arg8: memref<1x1x8x8xf32, #tpu.memory_space<vmem>>, %arg9: memref<8x32xf32, #tpu.memory_space<vmem>>) attributes {dimension_semantics = [#tpu.dimension_semantics<parallel>, #tpu.dimension_semantics<arbitrary>], iteration_bounds = array<i64: 2, 8>, scalar_prefetch = 0 : i64, scratch_operands = 1 : i64, tpu.core_type = #tpu.core_type<tc>, window_params = [{transform_indices = @transform_0, window_bounds = array<i64: 1, 8, 32>}, {transform_indices = @transform_1, window_bounds = array<i64: 1, 32, 12>}, {transform_indices = @transform_2, window_bounds = array<i64: 1, 1, 12>}, {transform_indices = @transform_3, window_bounds = array<i64: 1, 4, 32>}, {pipeline_mode = #tpu.pipeline_mode<synchronous>, transform_indices = @transform_4, window_bounds = array<i64: 1, 32>}, {transform_indices = @transform_5, window_bounds = array<i64: 1, 8, 32>}, {transform_indices = @transform_6, window_bounds = array<i64: 1, 1, 8, 8>}]} {
    %c0 = arith.constant 0 : index
    %c0_0 = arith.constant 0 : index
    %c0_1 = arith.constant 0 : index
    %0 = vector.load %arg2[%c0, %c0_0, %c0_1] : memref<1x8x32xf32, #tpu.memory_space<vmem>>, vector<1x8x32xf32>
    %1 = vector.shape_cast %0 : vector<1x8x32xf32> to vector<8x32xf32>
    %c0_2 = arith.constant 0 : index
    %c0_3 = arith.constant 0 : index
    %c0_4 = arith.constant 0 : index
    %2 = vector.load %arg3[%c0_2, %c0_3, %c0_4] : memref<1x32x12xf32, #tpu.memory_space<vmem>>, vector<1x32x12xf32>
    %3 = vector.shape_cast %2 : vector<1x32x12xf32> to vector<32x12xf32>
    %cst = arith.constant dense<0.000000e+00> : vector<8x12xf32>
    %4 = tpu.matmul %1, %3, %cst {dimension_numbers = #tpu.dot_dimension_numbers<[1], [0], [0], [1], [0, 0, 1, 1], [], []>} : vector<8x32xf32>, vector<32x12xf32>, vector<8x12xf32> -> vector<8x12xf32>
    %c0_5 = arith.constant 0 : index
    %c0_6 = arith.constant 0 : index
    %c0_7 = arith.constant 0 : index
    %5 = vector.load %arg4[%c0_5, %c0_6, %c0_7] : memref<1x1x12xf32, #tpu.memory_space<vmem>>, vector<1x1x12xf32>
    %6 = vector.shape_cast %5 : vector<1x1x12xf32> to vector<1x12xf32>
    %7 = vector.broadcast %6 : vector<1x12xf32> to vector<8x12xf32>
    %8 = arith.addf %4, %7 : vector<8x12xf32>
    %9 = vector.extract_strided_slice %8 {offsets = [0, 0], sizes = [8, 4], strides = [1, 1]} : vector<8x12xf32> to vector<8x4xf32>
    %cst_8 = arith.constant 5.000000e-01 : f32
    %10 = vector.broadcast %cst_8 : f32 to vector<8x4xf32>
    %11 = arith.mulf %9, %10 : vector<8x4xf32>
    %12 = vector.extract_strided_slice %8 {offsets = [0, 4], sizes = [8, 4], strides = [1, 1]} : vector<8x12xf32> to vector<8x4xf32>
    %13 = vector.extract_strided_slice %8 {offsets = [0, 8], sizes = [8, 4], strides = [1, 1]} : vector<8x12xf32> to vector<8x4xf32>
    %cst_9 = arith.constant dense<0.000000e+00> : vector<8x8xf32>
    %14 = tpu.matmul %11, %12, %cst_9 {dimension_numbers = #tpu.dot_dimension_numbers<[1], [1], [0], [0], [0, 0, 1, 0], [], []>} : vector<8x4xf32>, vector<8x4xf32>, vector<8x8xf32> -> vector<8x8xf32>
    %cst_10 = arith.constant dense<0xFF800000> : vector<8xf32>
    %15 = vector.multi_reduction <maximumf>, %14, %cst_10 [1] : vector<8x8xf32> to vector<8xf32>
    %16 = vector.shape_cast %15 : vector<8xf32> to vector<8x1xf32>
    %17 = vector.broadcast %16 : vector<8x1xf32> to vector<8x8xf32>
    %18 = arith.subf %14, %17 : vector<8x8xf32>
    %19 = math.exp %18 : vector<8x8xf32>
    %cst_11 = arith.constant dense<0.000000e+00> : vector<8xf32>
    %20 = vector.multi_reduction <add>, %19, %cst_11 [1] : vector<8x8xf32> to vector<8xf32>
    %21 = vector.shape_cast %20 : vector<8xf32> to vector<8x1xf32>
    %22 = tpu.reciprocal %21 {approx = true} : vector<8x1xf32> -> vector<8x1xf32>
    %23 = vector.broadcast %22 : vector<8x1xf32> to vector<8x8xf32>
    %24 = arith.mulf %19, %23 : vector<8x8xf32>
    %c0_12 = arith.constant 0 : index
    %c0_13 = arith.constant 0 : index
    %c0_14 = arith.constant 0 : index
    %c0_15 = arith.constant 0 : index
    %25 = vector.load %arg8[%c0_12, %c0_13, %c0_14, %c0_15] : memref<1x1x8x8xf32, #tpu.memory_space<vmem>>, vector<1x1x8x8xf32>
    %26 = vector.shape_cast %25 : vector<1x1x8x8xf32> to vector<8x8xf32>
    %27 = vector.shape_cast %24 : vector<8x8xf32> to vector<1x1x8x8xf32>
    tpu.vector_store %arg8[%c0_12, %c0_13, %c0_14, %c0_15], %27 {strides = array<i32>} : memref<1x1x8x8xf32, #tpu.memory_space<vmem>>, vector<1x1x8x8xf32>,
    %cst_16 = arith.constant dense<0.000000e+00> : vector<8x4xf32>
    %28 = tpu.matmul %24, %13, %cst_16 {dimension_numbers = #tpu.dot_dimension_numbers<[1], [0], [0], [1], [0, 0, 1, 1], [], []>} : vector<8x8xf32>, vector<8x4xf32>, vector<8x4xf32> -> vector<8x4xf32>
    %c0_17 = arith.constant 0 : index
    %c0_18 = arith.constant 0 : index
    %c0_19 = arith.constant 0 : index
    %29 = vector.load %arg5[%c0_17, %c0_18, %c0_19] : memref<1x4x32xf32, #tpu.memory_space<vmem>>, vector<1x4x32xf32>
    %30 = vector.shape_cast %29 : vector<1x4x32xf32> to vector<4x32xf32>
    %cst_20 = arith.constant dense<0.000000e+00> : vector<8x32xf32>
    %31 = tpu.matmul %28, %30, %cst_20 {dimension_numbers = #tpu.dot_dimension_numbers<[1], [0], [0], [1], [0, 0, 1, 1], [], []>} : vector<8x4xf32>, vector<4x32xf32>, vector<8x32xf32> -> vector<8x32xf32>
    %c0_i32 = arith.constant 0 : i32
    %32 = arith.cmpi eq, %arg1, %c0_i32 : i32
    %33 = arith.extui %32 : i1 to i32
    %c0_i32_21 = arith.constant 0 : i32
    %34 = arith.cmpi ne, %33, %c0_i32_21 : i32
    scf.if %34 {
      %cst_27 = arith.constant 0.000000e+00 : f32
      %41 = vector.broadcast %cst_27 : f32 to vector<8x32xf32>
      %c0_28 = arith.constant 0 : index
      %c0_29 = arith.constant 0 : index
      %42 = vector.load %arg9[%c0_28, %c0_29] : memref<8x32xf32, #tpu.memory_space<vmem>>, vector<8x32xf32>
      tpu.vector_store %arg9[%c0_28, %c0_29], %41 {strides = array<i32>} : memref<8x32xf32, #tpu.memory_space<vmem>>, vector<8x32xf32>,
    } else {
    }
    %c0_22 = arith.constant 0 : index
    %c0_23 = arith.constant 0 : index
    %35 = vector.load %arg9[%c0_22, %c0_23] : memref<8x32xf32, #tpu.memory_space<vmem>>, vector<8x32xf32>
    %36 = arith.addf %35, %31 : vector<8x32xf32>
    %c0_24 = arith.constant 0 : index
    %c0_25 = arith.constant 0 : index
    %37 = vector.load %arg9[%c0_24, %c0_25] : memref<8x32xf32, #tpu.memory_space<vmem>>, vector<8x32xf32>
    tpu.vector_store %arg9[%c0_24, %c0_25], %36 {strides = array<i32>} : memref<8x32xf32, #tpu.memory_space<vmem>>, vector<8x32xf32>,
    %c7_i32 = arith.constant 7 : i32
    %38 = arith.cmpi eq, %arg1, %c7_i32 : i32
    %39 = arith.extui %38 : i1 to i32
    %c0_i32_26 = arith.constant 0 : i32
    %40 = arith.cmpi ne, %39, %c0_i32_26 : i32
    scf.if %40 {
      %c0_27 = arith.constant 0 : index
      %c0_28 = arith.constant 0 : index
      %41 = vector.load %arg9[%c0_27, %c0_28] : memref<8x32xf32, #tpu.memory_space<vmem>>, vector<8x32xf32>
      %c0_29 = arith.constant 0 : index
      %c0_30 = arith.constant 0 : index
      %42 = vector.load %arg6[%c0_29, %c0_30] : memref<1x32xf32, #tpu.memory_space<vmem>>, vector<1x32xf32>
      %43 = vector.broadcast %42 : vector<1x32xf32> to vector<8x32xf32>
      %44 = arith.addf %41, %43 : vector<8x32xf32>
      %c0_31 = arith.constant 0 : index
      %c0_32 = arith.constant 0 : index
      %c0_33 = arith.constant 0 : index
      %45 = vector.load %arg7[%c0_31, %c0_32, %c0_33] : memref<1x8x32xf32, #tpu.memory_space<vmem>>, vector<1x8x32xf32>
      %46 = vector.shape_cast %45 : vector<1x8x32xf32> to vector<8x32xf32>
      %47 = vector.shape_cast %44 : vector<8x32xf32> to vector<1x8x32xf32>
      tpu.vector_store %arg7[%c0_31, %c0_32, %c0_33], %47 {strides = array<i32>} : memref<1x8x32xf32, #tpu.memory_space<vmem>>, vector<1x8x32xf32>,
    } else {
    }
    return
  }
  func.func @transform_0(%arg0: i32, %arg1: i32) -> (i32, i32, i32) {
    %c0_i32 = arith.constant 0 : i32
    %c0_i32_0 = arith.constant 0 : i32
    %c0_i32_1 = arith.constant 0 : i32
    return %arg0, %c0_i32, %c0_i32_0 : i32, i32, i32
  }
  func.func @transform_1(%arg0: i32, %arg1: i32) -> (i32, i32, i32) {
    %c0_i32 = arith.constant 0 : i32
    %c0_i32_0 = arith.constant 0 : i32
    %c0_i32_1 = arith.constant 0 : i32
    return %arg1, %c0_i32, %c0_i32_0 : i32, i32, i32
  }
  func.func @transform_2(%arg0: i32, %arg1: i32) -> (i32, i32, i32) {
    %c0_i32 = arith.constant 0 : i32
    %c0_i32_0 = arith.constant 0 : i32
    %c0_i32_1 = arith.constant 0 : i32
    return %arg1, %c0_i32, %c0_i32_0 : i32, i32, i32
  }
  func.func @transform_3(%arg0: i32, %arg1: i32) -> (i32, i32, i32) {
    %c0_i32 = arith.constant 0 : i32
    %c0_i32_0 = arith.constant 0 : i32
    %c0_i32_1 = arith.constant 0 : i32
    return %arg1, %c0_i32, %c0_i32_0 : i32, i32, i32
  }
  func.func @transform_4(%arg0: i32, %arg1: i32) -> (i32, i32) {
    %c0_i32 = arith.constant 0 : i32
    %c0_i32_0 = arith.constant 0 : i32
    %c0_i32_1 = arith.constant 0 : i32
    return %c0_i32, %c0_i32_0 : i32, i32
  }
  func.func @transform_5(%arg0: i32, %arg1: i32) -> (i32, i32, i32) {
    %c0_i32 = arith.constant 0 : i32
    %c0_i32_0 = arith.constant 0 : i32
    %c0_i32_1 = arith.constant 0 : i32
    return %arg0, %c0_i32, %c0_i32_0 : i32, i32, i32
  }
  func.func @transform_6(%arg0: i32, %arg1: i32) -> (i32, i32, i32, i32) {
    %c0_i32 = arith.constant 0 : i32
    %c0_i32_0 = arith.constant 0 : i32
    %c0_i32_1 = arith.constant 0 : i32
    return %arg0, %arg1, %c0_i32, %c0_i32_0 : i32, i32, i32, i32
  }
}

</mosaic_0001>

<llo_original>
// kernel: tpu_custom_call.1
$region0: #{tpu_custom_call.1}
  #allocation0 [shape = 'u32[]', space=smem, size = 0x4, offset = 0x4, fixed_abs, tag = 'smem constant byte address 0x4 - core index']
  #allocation1 [shape = 'u32[144,128]{1,0:T(1,128)}', space=vmem, size = 0x12000, scoped, tag = 'internal scratch']
  #allocation2 [shape = 'f32[8,32]{1,0:T(8,128)}', space=vmem, size = 0x1000, scoped, tag = 'scratch operand']
  %s0 = inlined_call_operand.vmem [shape: f32[2,8,32], index: 0, kind: input, shape index: {}]
  %s1 = inlined_call_operand.vmem [shape: f32[8,32,12], index: 1, kind: input, shape index: {}]
  %s2 = inlined_call_operand.vmem [shape: f32[8,1,12], index: 2, kind: input, shape index: {}]
  %s3 = inlined_call_operand.vmem [shape: f32[8,4,32], index: 3, kind: input, shape index: {}]
  %s4 = inlined_call_operand.vmem [shape: f32[1,32], index: 4, kind: input, shape index: {}]
  %s5 = inlined_call_operand.hbm [shape: f32[2,8,32], index: 5, kind: output, shape index: {0}]
  %s6 = inlined_call_operand.hbm [shape: f32[2,8,8,8], index: 6, kind: output, shape index: {1}]
  %7 = xla_tuple %s5, %s6
  %s8 = sld [smem:[#allocation0]]
  $region69: #{tpu_custom_call.1} parent=0
    _
  %s10 = ssub.s32 1, %s8
  %s11 = scalar_select 0, %s10, %s8
  $region1: #{tpu_custom_call.1} parent=0
    #allocation3 [shape = 'u8[8192]{0}', space=vmem, size = 0x2000, scoped, tag = 'output window, operand 0']
    #allocation4 [shape = 's32[2]{0}', space=sflag, size = 0x8, scoped, tag = 'scoped memory for tpu_custom_call.1']
    #allocation5 [shape = 'u8[8192]{0}', space=vmem, size = 0x2000, scoped, tag = 'output window, operand 1']
    #allocation6 [shape = 's32[2]{0}', space=sflag, size = 0x8, scoped, tag = 'scoped memory for tpu_custom_call.1']
    %12 = vsyncpa [#allocation4], 0
    %s13 = scalar_lea.sflag [#allocation4], 1
    %14 = vsyncpa %s13, 0
    %15 = vsyncpa [#allocation6], 0
    %s16 = scalar_lea.sflag [#allocation6], 1
    %17 = vsyncpa %s16, 0
    loop: start=0, step=1, limit=18
    $region2: #{tpu_custom_call.1} parent=1 // loop_pre_header
      _
    $region3: #{tpu_custom_call.1} parent=1 // loop_header
      %s19 = sphi 0, %s23
      %p20 = scmp.ge.s32.totalorder %s19, 18
      %s26 = sphi 0, %s38
      %s27 = sphi 0, %s34
      %s28 = sphi 0, %s26
      %s29 = sphi 0, %s27
      %s30 = sphi 0, %s28
      %s31 = sphi 0, %s29
      %s41 = sphi 0, %s43
      %s44 = sphi 0, %s41
      %s45 = sphi 0, %s44
      %s61 = sphi 0, %s45
      %s67 = sphi 0, %s69
      %s70 = sphi 0, %s67
      %s71 = sphi 0, %s70
      %s87 = sphi 0, %s71
      %s93 = sphi 0, %s95
      %s96 = sphi 0, %s93
      %s97 = sphi 0, %s96
      %s113 = sphi 0, %s97
      %s119 = sphi 0, %s121
      %s122 = sphi 0, %s119
      %s123 = sphi 0, %s122
      %s139 = sphi 0, %s123
      %s143 = sphi 0, %s143
      %s145 = sphi 0, %s143
      %s146 = sphi 0, %s145
      %s160 = sphi 0, %s146
      %s166 = sphi 0, %s168
      %s169 = sphi 0, %s166
      %s170 = sphi 0, %s169
      %s186 = sphi 0, %s170
      %s194 = sphi 0, %s196
      %s197 = sphi 0, %s194
      %s198 = sphi 0, %s197
      %s214 = sphi 0, %s198
    $region4: #{tpu_custom_call.1} parent=1 // loop_header_branch
      %22 = sbr.rel (%p20) target = $region8
    $region5: #{tpu_custom_call.1} parent=1 // loop_body
      %s24 = ssub.s32 %s19, 1
      %s25 = ssub.s32 %s19, 2
      %s32 = sadd.s32 1, %s27
      %p33 = scmp.ge.s32.totalorder %s32, 8
      %s34 = scalar_select %p33, 0, %s32
      %s35 = sadd.s32 1, %s26
      %s36 = scalar_select %p33, %s35, %s26
      %p37 = scmp.ge.s32.totalorder %s36, 2
      %s38 = scalar_select %p37, 0, %s36
      %s39 = ssub.s32 %s26, %s38
      %p40 = scmp.eq.s32.totalorder %s39, 0
      %s42 = sadd.s32 %s41, 1
      %s43 = scalar_select %p40, %s41, %s42
      %p46 = pneg %p40
      %p47 = scmp.eq.s32.totalorder %s19, 15
      %p48 = por %p46, %p47
      %p49 = scmp.ne.s32.totalorder %s41, %s44
      %p50 = scmp.eq.s32.totalorder %s19, 0
      %p51 = por %p49, %p50
      %p52 = scmp.ne.s32.totalorder %s41, %s44
      %p53 = scmp.eq.s32.totalorder %s24, 15
      %p54 = por %p52, %p53
      %p55 = scmp.ne.s32.totalorder %s44, %s45
      %p56 = scmp.eq.s32.totalorder %s24, 0
      %p57 = por %p55, %p56
      %p58 = scmp.ne.s32.totalorder %s44, %s45
      %p59 = scmp.eq.s32.totalorder %s25, 15
      %p60 = por %p58, %p59
      %p62 = scmp.ne.s32.totalorder %s45, %s61
      %p63 = scmp.eq.s32.totalorder %s25, 0
      %p64 = por %p62, %p63
      %s65 = ssub.s32 %s27, %s34
      %p66 = scmp.eq.s32.totalorder %s65, 0
      %s68 = sadd.s32 %s67, 1
      %s69 = scalar_select %p66, %s67, %s68
      %p72 = pneg %p66
      %p73 = scmp.eq.s32.totalorder %s19, 15
      %p74 = por %p72, %p73
      %p75 = scmp.ne.s32.totalorder %s67, %s70
      %p76 = scmp.eq.s32.totalorder %s19, 0
      %p77 = por %p75, %p76
      %p78 = scmp.ne.s32.totalorder %s67, %s70
      %p79 = scmp.eq.s32.totalorder %s24, 15
      %p80 = por %p78, %p79
      %p81 = scmp.ne.s32.totalorder %s70, %s71
      %p82 = scmp.eq.s32.totalorder %s24, 0
      %p83 = por %p81, %p82
      %p84 = scmp.ne.s32.totalorder %s70, %s71
      %p85 = scmp.eq.s32.totalorder %s25, 15
      %p86 = por %p84, %p85
      %p88 = scmp.ne.s32.totalorder %s71, %s87
      %p89 = scmp.eq.s32.totalorder %s25, 0
      %p90 = por %p88, %p89
      %s91 = ssub.s32 %s27, %s34
      %p92 = scmp.eq.s32.totalorder %s91, 0
      %s94 = sadd.s32 %s93, 1
      %s95 = scalar_select %p92, %s93, %s94
      %p98 = pneg %p92
      %p99 = scmp.eq.s32.totalorder %s19, 15
      %p100 = por %p98, %p99
      %p101 = scmp.ne.s32.totalorder %s93, %s96
      %p102 = scmp.eq.s32.totalorder %s19, 0
      %p103 = por %p101, %p102
      %p104 = scmp.ne.s32.totalorder %s93, %s96
      %p105 = scmp.eq.s32.totalorder %s24, 15
      %p106 = por %p104, %p105
      %p107 = scmp.ne.s32.totalorder %s96, %s97
      %p108 = scmp.eq.s32.totalorder %s24, 0
      %p109 = por %p107, %p108
      %p110 = scmp.ne.s32.totalorder %s96, %s97
      %p111 = scmp.eq.s32.totalorder %s25, 15
      %p112 = por %p110, %p111
      %p114 = scmp.ne.s32.totalorder %s97, %s113
      %p115 = scmp.eq.s32.totalorder %s25, 0
      %p116 = por %p114, %p115
      %s117 = ssub.s32 %s27, %s34
      %p118 = scmp.eq.s32.totalorder %s117, 0
      %s120 = sadd.s32 %s119, 1
      %s121 = scalar_select %p118, %s119, %s120
      %p124 = pneg %p118
      %p125 = scmp.eq.s32.totalorder %s19, 15
      %p126 = por %p124, %p125
      %p127 = scmp.ne.s32.totalorder %s119, %s122
      %p128 = scmp.eq.s32.totalorder %s19, 0
      %p129 = por %p127, %p128
      %p130 = scmp.ne.s32.totalorder %s119, %s122
      %p131 = scmp.eq.s32.totalorder %s24, 15
      %p132 = por %p130, %p131
      %p133 = scmp.ne.s32.totalorder %s122, %s123
      %p134 = scmp.eq.s32.totalorder %s24, 0
      %p135 = por %p133, %p134
      %p136 = scmp.ne.s32.totalorder %s122, %s123
      %p137 = scmp.eq.s32.totalorder %s25, 15
      %p138 = por %p136, %p137
      %p140 = scmp.ne.s32.totalorder %s123, %s139
      %p141 = scmp.eq.s32.totalorder %s25, 0
      %p142 = por %p140, %p141
      %s144 = sadd.s32 %s143, 1
      %p147 = scmp.eq.s32.totalorder %s19, 15
      %p148 = scmp.ne.s32.totalorder %s143, %s145
      %p149 = scmp.eq.s32.totalorder %s19, 0
      %p150 = por %p148, %p149
      %p151 = scmp.ne.s32.totalorder %s143, %s145
      %p152 = scmp.eq.s32.totalorder %s24, 15
      %p153 = por %p151, %p152
      %p154 = scmp.ne.s32.totalorder %s145, %s146
      %p155 = scmp.eq.s32.totalorder %s24, 0
      %p156 = por %p154, %p155
      %p157 = scmp.ne.s32.totalorder %s145, %s146
      %p158 = scmp.eq.s32.totalorder %s25, 15
      %p159 = por %p157, %p158
      %p161 = scmp.ne.s32.totalorder %s146, %s160
      %p162 = scmp.eq.s32.totalorder %s25, 0
      %p163 = por %p161, %p162
      %s164 = ssub.s32 %s26, %s38
      %p165 = scmp.eq.s32.totalorder %s164, 0
      %s167 = sadd.s32 %s166, 1
      %s168 = scalar_select %p165, %s166, %s167
      %p171 = pneg %p165
      %p172 = scmp.eq.s32.totalorder %s19, 15
      %p173 = por %p171, %p172
      %p174 = scmp.ne.s32.totalorder %s166, %s169
      %p175 = scmp.eq.s32.totalorder %s19, 0
      %p176 = por %p174, %p175
      %p177 = scmp.ne.s32.totalorder %s166, %s169
      %p178 = scmp.eq.s32.totalorder %s24, 15
      %p179 = por %p177, %p178
      %p180 = scmp.ne.s32.totalorder %s169, %s170
      %p181 = scmp.eq.s32.totalorder %s24, 0
      %p182 = por %p180, %p181
      %p183 = scmp.ne.s32.totalorder %s169, %s170
      %p184 = scmp.eq.s32.totalorder %s25, 15
      %p185 = por %p183, %p184
      %p187 = scmp.ne.s32.totalorder %s170, %s186
      %p188 = scmp.eq.s32.totalorder %s25, 0
      %p189 = por %p187, %p188
      %s190 = ssub.s32 %s26, %s38
      %s191 = ssub.s32 %s27, %s34
      %s192 = sor.u32 %s190, %s191
      %p193 = scmp.eq.s32.totalorder %s192, 0
      %s195 = sadd.s32 %s194, 1
      %s196 = scalar_select %p193, %s194, %s195
      %p199 = pneg %p193
      %p200 = scmp.eq.s32.totalorder %s19, 15
      %p201 = por %p199, %p200
      %p202 = scmp.ne.s32.totalorder %s194, %s197
      %p203 = scmp.eq.s32.totalorder %s19, 0
      %p204 = por %p202, %p203
      %p205 = scmp.ne.s32.totalorder %s194, %s197
      %p206 = scmp.eq.s32.totalorder %s24, 15
      %p207 = por %p205, %p206
      %p208 = scmp.ne.s32.totalorder %s197, %s198
      %p209 = scmp.eq.s32.totalorder %s24, 0
      %p210 = por %p208, %p209
      %p211 = scmp.ne.s32.totalorder %s197, %s198
      %p212 = scmp.eq.s32.totalorder %s25, 15
      %p213 = por %p211, %p212
      %p215 = scmp.ne.s32.totalorder %s198, %s214
      %p216 = scmp.eq.s32.totalorder %s25, 0
      %p217 = por %p215, %p216
      %p218 = scmp.le.s32.totalorder 1, %s19
      %p219 = scmp.lt.s32.totalorder %s19, 17
      %p220 = pnand %p218, %p219
      %p221 = pneg %p220
      // Predicated region
      $region9: #{tpu_custom_call.1} parent=5 // pred_check
        _
      $region10: #{tpu_custom_call.1} parent=5 // pred_check_branch
        %223 = sbr.rel (%p220) target = $region12
      $region11: #{tpu_custom_call.1} parent=5 // pred_region
        %s224 = ssub.s32 %s19, 1
        // Predicated region
        $region13: #{tpu_custom_call.1} parent=11 // pred_check
          %p225 = pneg %p156
        $region14: #{tpu_custom_call.1} parent=11 // pred_check_branch
          %227 = sbr.rel (%p225) target = $region16
        $region15: #{tpu_custom_call.1} parent=11 // pred_region
          _
        $region16: #{tpu_custom_call.1} parent=11 // pred_fallthru
          _
      $region12: #{tpu_custom_call.1} parent=5 // pred_fallthru
        _
      %p228 = scmp.lt.s32.totalorder %s19, 16
      // Predicated region
      $region17: #{tpu_custom_call.1} parent=5 // pred_check
        %p229 = pneg %p228
      $region18: #{tpu_custom_call.1} parent=5 // pred_check_branch
        %231 = sbr.rel (%p229) target = $region20
      $region19: #{tpu_custom_call.1} parent=5 // pred_region
        // Predicated region
        $region21: #{tpu_custom_call.1} parent=19 // pred_check
          %p232 = pneg %p51
        $region22: #{tpu_custom_call.1} parent=19 // pred_check_branch
          %234 = sbr.rel (%p232) target = $region24
        $region23: #{tpu_custom_call.1} parent=19 // pred_region
          %p235 = scmp.lt.s32.totalorder %s26, 1
          %s236 = scalar_select %p235, %s26, 1
          %s237 = smul.addr %s236, 8
          %s238 = scalar_lea.vmem %s0, %s237
        $region24: #{tpu_custom_call.1} parent=19 // pred_fallthru
          _
        // Predicated region
        $region25: #{tpu_custom_call.1} parent=19 // pred_check
          %p239 = pneg %p77
        $region26: #{tpu_custom_call.1} parent=19 // pred_check_branch
          %241 = sbr.rel (%p239) target = $region28
        $region27: #{tpu_custom_call.1} parent=19 // pred_region
          %p242 = scmp.lt.s32.totalorder %s27, 7
          %s243 = scalar_select %p242, %s27, 7
          %s244 = smul.addr %s243, 4
          %s245 = smul.addr %s244, 8
          %s246 = scalar_lea.vmem %s1, %s245
        $region28: #{tpu_custom_call.1} parent=19 // pred_fallthru
          _
        // Predicated region
        $region29: #{tpu_custom_call.1} parent=19 // pred_check
          %p247 = pneg %p103
        $region30: #{tpu_custom_call.1} parent=19 // pred_check_branch
          %249 = sbr.rel (%p247) target = $region32
        $region31: #{tpu_custom_call.1} parent=19 // pred_region
          %p250 = scmp.lt.s32.totalorder %s27, 7
          %s251 = scalar_select %p250, %s27, 7
          %s252 = scalar_lea.vmem %s2, %s251
        $region32: #{tpu_custom_call.1} parent=19 // pred_fallthru
          _
        // Predicated region
        $region33: #{tpu_custom_call.1} parent=19 // pred_check
          %p253 = pneg %p129
        $region34: #{tpu_custom_call.1} parent=19 // pred_check_branch
          %255 = sbr.rel (%p253) target = $region36
        $region35: #{tpu_custom_call.1} parent=19 // pred_region
          %p256 = scmp.lt.s32.totalorder %s27, 7
          %s257 = scalar_select %p256, %s27, 7
          %s258 = smul.addr %s257, 4
          %s259 = scalar_lea.vmem %s3, %s258
        $region36: #{tpu_custom_call.1} parent=19 // pred_fallthru
          _
      $region20: #{tpu_custom_call.1} parent=5 // pred_fallthru
        _
      %p260 = scmp.le.s32.totalorder 1, %s19
      %p261 = scmp.lt.s32.totalorder %s19, 17
      %p262 = pnand %p260, %p261
      %p263 = pneg %p262
      // Predicated region
      $region37: #{tpu_custom_call.1} parent=5 // pred_check
        _
      $region38: #{tpu_custom_call.1} parent=5 // pred_check_branch
        %265 = sbr.rel (%p262) target = $region40
      $region39: #{tpu_custom_call.1} parent=5 // pred_region
        %s266 = ssub.s32 %s19, 1
        %p267 = scmp.lt.s32.totalorder %s28, 1
        %s268 = scalar_select %p267, %s28, 1
        %s269 = smul.addr %s268, 8
        %s270 = scalar_lea.vmem %s0, %s269
        %p271 = pneg %p57
        %p272 = pneg %p54
        %p273 = scmp.lt.s32.totalorder %s29, 7
        %s274 = scalar_select %p273, %s29, 7
        %s275 = smul.addr %s274, 4
        %s276 = smul.addr %s275, 8
        %s277 = scalar_lea.vmem %s1, %s276
        %p278 = pneg %p83
        %p279 = pneg %p80
        %p280 = scmp.lt.s32.totalorder %s29, 7
        %s281 = scalar_select %p280, %s29, 7
        %s282 = scalar_lea.vmem %s2, %s281
        %p283 = pneg %p109
        %p284 = pneg %p106
        %p285 = scmp.lt.s32.totalorder %s29, 7
        %s286 = scalar_select %p285, %s29, 7
        %s287 = smul.addr %s286, 4
        %s288 = scalar_lea.vmem %s3, %s287
        %p289 = pneg %p135
        %p290 = pneg %p132
        %p291 = pneg %p156
        %p292 = pneg %p153
        %p293 = pneg %p182
        %p294 = pneg %p179
        %s295 = sand.u32 %s169, 1
        %s296 = scalar_lea.sflag [#allocation4], %s295
        %s297 = sand.u32 %s169, 1
        %s298 = smul.addr %s297, 8
        %s299 = scalar_lea.vmem [#allocation3], %s298
        %p300 = pneg %p210
        %p301 = pneg %p207
        %s302 = sand.u32 %s197, 1
        %s303 = scalar_lea.sflag [#allocation6], %s302
        %s304 = sand.u32 %s197, 1
        %s305 = smul.addr %s304, 8
        %s306 = scalar_lea.vmem [#allocation5], %s305
        %p307 = scmp.lt.s32.totalorder %s28, 1
        %s308 = scalar_select %p307, %s28, 1
        %s309 = smul.addr %s308, 8
        %s310 = scalar_lea.vmem %s0, %s309
        %p311 = scmp.lt.s32.totalorder %s29, 7
        %s312 = scalar_select %p311, %s29, 7
        %s313 = smul.addr %s312, 4
        %s314 = smul.addr %s313, 8
        %s315 = scalar_lea.vmem %s1, %s314
        %p316 = scmp.lt.s32.totalorder %s29, 7
        %s317 = scalar_select %p316, %s29, 7
        %s318 = scalar_lea.vmem %s2, %s317
        %p319 = scmp.lt.s32.totalorder %s29, 7
        %s320 = scalar_select %p319, %s29, 7
        %s321 = smul.addr %s320, 4
        %s322 = scalar_lea.vmem %s3, %s321
        %v323 = vld [vmem:[%s310] sm:$0xff]
        %v324 = vld [vmem:[%s315] sm:$0xff]
        %v325 = vld [vmem:[%s315 + $0x8] sm:$0xff]
        %v326 = vld [vmem:[%s315 + $0x10] sm:$0xff]
        %v327 = vld [vmem:[%s315 + $0x18] sm:$0xff]
        %v328 = vld [vmem:[%s318] sm:$0x1]
        %v330 = vlaneseq
        %v331 = vshrl.u32 %v330, 7
        %v332 = vsub.s32 0, %v331
        %v333 = vrot.slane %v328, %v332
        %vm335 = vcmask 261120
        %v337 = vsel %vm335, %v323, 0
        %339 = vmatprep.subr.mxu0 0.0
        %340 = vmatpush1.msra.mxu0 0.0
        %341 = vmatprep.subr.mxu0 0.0
        %342 = vmatpush1.msra.mxu0 0.0
        %343 = vmatprep.subr.mxu0 0.0
        %344 = vmatpush1.msra.mxu0 0.0
        %345 = vmatprep.subr.mxu0 0.0
        %346 = vmatpush1.msra.mxu0 0.0
        %347 = vmatprep.subr.mxu0 0.0
        %348 = vmatpush1.msra.mxu0 0.0
        %349 = vmatprep.subr.mxu0 0.0
        %350 = vmatpush1.msra.mxu0 0.0
        %351 = vmatprep.subr.mxu0 0.0
        %352 = vmatpush1.msra.mxu0 0.0
        %353 = vmatprep.subr.mxu0 0.0
        %354 = vmatpush1.msra.mxu0 0.0
        %355 = vmatprep.subr.mxu0 0.0
        %356 = vmatpush1.msra.mxu0 0.0
        %357 = vmatprep.subr.mxu0 0.0
        %358 = vmatpush1.msra.mxu0 0.0
        %359 = vmatprep.subr.mxu0 0.0
        %360 = vmatpush1.msra.mxu0 0.0
        %361 = vmatprep.subr.mxu0 0.0
        %362 = vmatpush1.msra.mxu0 0.0
        %363 = vmatprep.subr.mxu0 0.0
        %364 = vmatpush1.msra.mxu0 %v327
        %365 = vmatprep.subr.mxu0 0.0
        %366 = vmatpush1.msra.mxu0 %v326
        %367 = vmatprep.subr.mxu0 0.0
        %368 = vmatpush1.msra.mxu0 %v325
        %369 = vmatprep.subr.mxu0 0.0
        %370 = vmatpush1.msra.mxu0 %v324
        %371 = vmatprep.subr.mxu0 0.0
        %372 = vmatpush2.msra.mxu0 0.0
        %373 = vmatprep.subr.mxu0 0.0
        %374 = vmatpush2.msra.mxu0 0.0
        %375 = vmatprep.subr.mxu0 0.0
        %376 = vmatpush2.msra.mxu0 0.0
        %377 = vmatprep.subr.mxu0 0.0
        %378 = vmatpush2.msra.mxu0 0.0
        %379 = vmatprep.subr.mxu0 0.0
        %380 = vmatpush2.msra.mxu0 0.0
        %381 = vmatprep.subr.mxu0 0.0
        %382 = vmatpush2.msra.mxu0 0.0
        %383 = vmatprep.subr.mxu0 0.0
        %384 = vmatpush2.msra.mxu0 0.0
        %385 = vmatprep.subr.mxu0 0.0
        %386 = vmatpush2.msra.mxu0 0.0
        %387 = vmatprep.subr.mxu0 0.0
        %388 = vmatpush2.msra.mxu0 0.0
        %389 = vmatprep.subr.mxu0 0.0
        %390 = vmatpush2.msra.mxu0 0.0
        %391 = vmatprep.subr.mxu0 0.0
        %392 = vmatpush2.msra.mxu0 0.0
        %393 = vmatprep.subr.mxu0 0.0
        %394 = vmatpush2.msra.mxu0 0.0
        %395 = vmatprep.subr.mxu0 0.0
        %396 = vmatpush2.msra.mxu0 0.0
        %397 = vmatprep.subr.mxu0 0.0
        %398 = vmatpush2.msra.mxu0 0.0
        %399 = vmatprep.subr.mxu0 0.0
        %400 = vmatpush2.msra.mxu0 0.0
        %401 = vmatprep.subr.mxu0 0.0
        %402 = vmatpush2.msra.mxu0 0.0
        %403 = vmatprep.mubr.f32.mxu0 0.0
        %404 = vmatmul.mubr.f32.gmra.mxu0 %v337
        %v405 = vpop.f32.mrf.mxu0
        %v406 = vadd.f32 %v333, %v405
        %v407 = vpop.f32.mrf.mxu0
        %408 = vdwg.mxu0
        %v409 = vmul.f32 %v406, 0.5
        %411 = vrot.lane.b32.xlu0 %v406, 124
        %v412 = vpop.permute.xlu0 %411
        %vm413 = vcmask 31744
        %v415 = vsel %vm413, %v409, 0
        %v417 = vsel %vm413, %v412, 0
        %419 = vmatprep.subr.mxu0 0.0
        %420 = vmatpush1.xpose.msra.mxu0 0.0
        %421 = vmatprep.subr.mxu0 0.0
        %422 = vmatpush1.xpose.msra.mxu0 0.0
        %423 = vmatprep.subr.mxu0 0.0
        %424 = vmatpush1.xpose.msra.mxu0 0.0
        %425 = vmatprep.subr.mxu0 0.0
        %426 = vmatpush1.xpose.msra.mxu0 0.0
        %427 = vmatprep.subr.mxu0 0.0
        %428 = vmatpush1.xpose.msra.mxu0 0.0
        %429 = vmatprep.subr.mxu0 0.0
        %430 = vmatpush1.xpose.msra.mxu0 0.0
        %431 = vmatprep.subr.mxu0 0.0
        %432 = vmatpush1.xpose.msra.mxu0 0.0
        %433 = vmatprep.subr.mxu0 0.0
        %434 = vmatpush1.xpose.msra.mxu0 0.0
        %435 = vmatprep.subr.mxu0 0.0
        %436 = vmatpush1.xpose.msra.mxu0 0.0
        %437 = vmatprep.subr.mxu0 0.0
        %438 = vmatpush1.xpose.msra.mxu0 0.0
        %439 = vmatprep.subr.mxu0 0.0
        %440 = vmatpush1.xpose.msra.mxu0 0.0
        %441 = vmatprep.subr.mxu0 0.0
        %442 = vmatpush1.xpose.msra.mxu0 0.0
        %443 = vmatprep.subr.mxu0 0.0
        %444 = vmatpush1.xpose.msra.mxu0 0.0
        %445 = vmatprep.subr.mxu0 0.0
        %446 = vmatpush1.xpose.msra.mxu0 0.0
        %447 = vmatprep.subr.mxu0 0.0
        %448 = vmatpush1.xpose.msra.mxu0 0.0
        %449 = vmatprep.subr.mxu0 0.0
        %450 = vmatpush1.xpose.msra.mxu0 %v417
        %451 = vmatprep.subr.mxu0 0.0
        %452 = vmatpush2.xpose.msra.mxu0 0.0
        %453 = vmatprep.subr.mxu0 0.0
        %454 = vmatpush2.xpose.msra.mxu0 0.0
        %455 = vmatprep.subr.mxu0 0.0
        %456 = vmatpush2.xpose.msra.mxu0 0.0
        %457 = vmatprep.subr.mxu0 0.0
        %458 = vmatpush2.xpose.msra.mxu0 0.0
        %459 = vmatprep.subr.mxu0 0.0
        %460 = vmatpush2.xpose.msra.mxu0 0.0
        %461 = vmatprep.subr.mxu0 0.0
        %462 = vmatpush2.xpose.msra.mxu0 0.0
        %463 = vmatprep.subr.mxu0 0.0
        %464 = vmatpush2.xpose.msra.mxu0 0.0
        %465 = vmatprep.subr.mxu0 0.0
        %466 = vmatpush2.xpose.msra.mxu0 0.0
        %467 = vmatprep.subr.mxu0 0.0
        %468 = vmatpush2.xpose.msra.mxu0 0.0
        %469 = vmatprep.subr.mxu0 0.0
        %470 = vmatpush2.xpose.msra.mxu0 0.0
        %471 = vmatprep.subr.mxu0 0.0
        %472 = vmatpush2.xpose.msra.mxu0 0.0
        %473 = vmatprep.subr.mxu0 0.0
        %474 = vmatpush2.xpose.msra.mxu0 0.0
        %475 = vmatprep.subr.mxu0 0.0
        %476 = vmatpush2.xpose.msra.mxu0 0.0
        %477 = vmatprep.subr.mxu0 0.0
        %478 = vmatpush2.xpose.msra.mxu0 0.0
        %479 = vmatprep.subr.mxu0 0.0
        %480 = vmatpush2.xpose.msra.mxu0 0.0
        %481 = vmatprep.subr.mxu0 0.0
        %482 = vmatpush2.xpose.msra.mxu0 0.0
        %483 = vmatprep.mubr.f32.mxu0 0.0
        %484 = vmatmul.mubr.f32.gmra.mxu0 %v415
        %v485 = vpop.f32.mrf.mxu0
        %v486 = vadd.f32 0.0, %v485
        %v487 = vpop.f32.mrf.mxu0
        %488 = vdwg.mxu0
        %vm489 = vcmask 64512
        %v490 = vsel %vm489, %v486, -inf
        %491 = vmax.xlane.f32.xlu0 %v490
        %v492 = vpop.xlane.xlu0 %491
        %v493 = vsub.f32 %v486, %v492
        %v494 = vmul.f32 %v493, 1.442695
        %v495 = vpow.pop %v494
        %v496 = vsel %vm489, %v495, 0.0
        %497 = vadd.xlane.f32.xlu0 %v496
        %v498 = vpop.xlane.xlu0 %497
        %v499 = vrcp.pop %v498
        %v500 = vmul.f32 %v495, %v499
        %501 = vst.msk [vmem:[%s306] sm:$0xff] %vm489, %v500
        %502 = vrot.lane.b32.xlu0 %v406, 120
        %v503 = vpop.permute.xlu0 %502
        %v506 = vsel %vm489, %v500, 0
        %508 = vmatprep.subr.mxu0 0.0
        %509 = vmatpush1.msra.mxu0 0.0
        %510 = vmatprep.subr.mxu0 0.0
        %511 = vmatpush1.msra.mxu0 0.0
        %512 = vmatprep.subr.mxu0 0.0
        %513 = vmatpush1.msra.mxu0 0.0
        %514 = vmatprep.subr.mxu0 0.0
        %515 = vmatpush1.msra.mxu0 0.0
        %516 = vmatprep.subr.mxu0 0.0
        %517 = vmatpush1.msra.mxu0 0.0
        %518 = vmatprep.subr.mxu0 0.0
        %519 = vmatpush1.msra.mxu0 0.0
        %520 = vmatprep.subr.mxu0 0.0
        %521 = vmatpush1.msra.mxu0 0.0
        %522 = vmatprep.subr.mxu0 0.0
        %523 = vmatpush1.msra.mxu0 0.0
        %524 = vmatprep.subr.mxu0 0.0
        %525 = vmatpush1.msra.mxu0 0.0
        %526 = vmatprep.subr.mxu0 0.0
        %527 = vmatpush1.msra.mxu0 0.0
        %528 = vmatprep.subr.mxu0 0.0
        %529 = vmatpush1.msra.mxu0 0.0
        %530 = vmatprep.subr.mxu0 0.0
        %531 = vmatpush1.msra.mxu0 0.0
        %532 = vmatprep.subr.mxu0 0.0
        %533 = vmatpush1.msra.mxu0 0.0
        %534 = vmatprep.subr.mxu0 0.0
        %535 = vmatpush1.msra.mxu0 0.0
        %536 = vmatprep.subr.mxu0 0.0
        %537 = vmatpush1.msra.mxu0 0.0
        %538 = vmatprep.subr.mxu0 0.0
        %539 = vmatpush1.msra.mxu0 %v503
        %540 = vmatprep.subr.mxu0 0.0
        %541 = vmatpush2.msra.mxu0 0.0
        %542 = vmatprep.subr.mxu0 0.0
        %543 = vmatpush2.msra.mxu0 0.0
        %544 = vmatprep.subr.mxu0 0.0
        %545 = vmatpush2.msra.mxu0 0.0
        %546 = vmatprep.subr.mxu0 0.0
        %547 = vmatpush2.msra.mxu0 0.0
        %548 = vmatprep.subr.mxu0 0.0
        %549 = vmatpush2.msra.mxu0 0.0
        %550 = vmatprep.subr.mxu0 0.0
        %551 = vmatpush2.msra.mxu0 0.0
        %552 = vmatprep.subr.mxu0 0.0
        %553 = vmatpush2.msra.mxu0 0.0
        %554 = vmatprep.subr.mxu0 0.0
        %555 = vmatpush2.msra.mxu0 0.0
        %556 = vmatprep.subr.mxu0 0.0
        %557 = vmatpush2.msra.mxu0 0.0
        %558 = vmatprep.subr.mxu0 0.0
        %559 = vmatpush2.msra.mxu0 0.0
        %560 = vmatprep.subr.mxu0 0.0
        %561 = vmatpush2.msra.mxu0 0.0
        %562 = vmatprep.subr.mxu0 0.0
        %563 = vmatpush2.msra.mxu0 0.0
        %564 = vmatprep.subr.mxu0 0.0
        %565 = vmatpush2.msra.mxu0 0.0
        %566 = vmatprep.subr.mxu0 0.0
        %567 = vmatpush2.msra.mxu0 0.0
        %568 = vmatprep.subr.mxu0 0.0
        %569 = vmatpush2.msra.mxu0 0.0
        %570 = vmatprep.subr.mxu0 0.0
        %571 = vmatpush2.msra.mxu0 0.0
        %572 = vmatprep.mubr.f32.mxu0 0.0
        %573 = vmatmul.mubr.f32.gmra.mxu0 %v506
        %v574 = vpop.f32.mrf.mxu0
        %v575 = vadd.f32 0.0, %v574
        %v576 = vpop.f32.mrf.mxu0
        %577 = vdwg.mxu0
        %v578 = vld [vmem:[%s322] sm:$0xf]
        %v580 = vsel %vm413, %v575, 0
        %vm582 = vcmask 1043456
        %v584 = vsel %vm582, %v578, 0
        %586 = vmatprep.subr.mxu0 0.0
        %587 = vmatpush1.msra.mxu0 0.0
        %588 = vmatprep.subr.mxu0 0.0
        %589 = vmatpush1.msra.mxu0 0.0
        %590 = vmatprep.subr.mxu0 0.0
        %591 = vmatpush1.msra.mxu0 0.0
        %592 = vmatprep.subr.mxu0 0.0
        %593 = vmatpush1.msra.mxu0 0.0
        %594 = vmatprep.subr.mxu0 0.0
        %595 = vmatpush1.msra.mxu0 0.0
        %596 = vmatprep.subr.mxu0 0.0
        %597 = vmatpush1.msra.mxu0 0.0
        %598 = vmatprep.subr.mxu0 0.0
        %599 = vmatpush1.msra.mxu0 0.0
        %600 = vmatprep.subr.mxu0 0.0
        %601 = vmatpush1.msra.mxu0 0.0
        %602 = vmatprep.subr.mxu0 0.0
        %603 = vmatpush1.msra.mxu0 0.0
        %604 = vmatprep.subr.mxu0 0.0
        %605 = vmatpush1.msra.mxu0 0.0
        %606 = vmatprep.subr.mxu0 0.0
        %607 = vmatpush1.msra.mxu0 0.0
        %608 = vmatprep.subr.mxu0 0.0
        %609 = vmatpush1.msra.mxu0 0.0
        %610 = vmatprep.subr.mxu0 0.0
        %611 = vmatpush1.msra.mxu0 0.0
        %612 = vmatprep.subr.mxu0 0.0
        %613 = vmatpush1.msra.mxu0 0.0
        %614 = vmatprep.subr.mxu0 0.0
        %615 = vmatpush1.msra.mxu0 0.0
        %616 = vmatprep.subr.mxu0 0.0
        %617 = vmatpush1.msra.mxu0 %v584
        %618 = vmatprep.subr.mxu0 0.0
        %619 = vmatpush2.msra.mxu0 0.0
        %620 = vmatprep.subr.mxu0 0.0
        %621 = vmatpush2.msra.mxu0 0.0
        %622 = vmatprep.subr.mxu0 0.0
        %623 = vmatpush2.msra.mxu0 0.0
        %624 = vmatprep.subr.mxu0 0.0
        %625 = vmatpush2.msra.mxu0 0.0
        %626 = vmatprep.subr.mxu0 0.0
        %627 = vmatpush2.msra.mxu0 0.0
        %628 = vmatprep.subr.mxu0 0.0
        %629 = vmatpush2.msra.mxu0 0.0
        %630 = vmatprep.subr.mxu0 0.0
        %631 = vmatpush2.msra.mxu0 0.0
        %632 = vmatprep.subr.mxu0 0.0
        %633 = vmatpush2.msra.mxu0 0.0
        %634 = vmatprep.subr.mxu0 0.0
        %635 = vmatpush2.msra.mxu0 0.0
        %636 = vmatprep.subr.mxu0 0.0
        %637 = vmatpush2.msra.mxu0 0.0
        %638 = vmatprep.subr.mxu0 0.0
        %639 = vmatpush2.msra.mxu0 0.0
        %640 = vmatprep.subr.mxu0 0.0
        %641 = vmatpush2.msra.mxu0 0.0
        %642 = vmatprep.subr.mxu0 0.0
        %643 = vmatpush2.msra.mxu0 0.0
        %644 = vmatprep.subr.mxu0 0.0
        %645 = vmatpush2.msra.mxu0 0.0
        %646 = vmatprep.subr.mxu0 0.0
        %647 = vmatpush2.msra.mxu0 0.0
        %648 = vmatprep.subr.mxu0 0.0
        %649 = vmatpush2.msra.mxu0 0.0
        %650 = vmatprep.mubr.f32.mxu0 0.0
        %651 = vmatmul.mubr.f32.gmra.mxu0 %v580
        %v652 = vpop.f32.mrf.mxu0
        %v653 = vadd.f32 0.0, %v652
        %v654 = vpop.f32.mrf.mxu0
        %655 = vdwg.mxu0
        %p656 = scmp.eq.s32.totalorder %s29, 0
        // Predicated region
        $region41: #{tpu_custom_call.1} parent=39 // pred_check
          %p657 = pneg %p656
        $region42: #{tpu_custom_call.1} parent=39 // pred_check_branch
          %659 = sbr.rel (%p657) target = $region44
        $region43: #{tpu_custom_call.1} parent=39 // pred_region
          %660 = vst.msk [vmem:[#allocation2] sm:$0xff] %vm335, 0.0
        $region44: #{tpu_custom_call.1} parent=39 // pred_fallthru
          _
        %v661 = vld [vmem:[#allocation2] sm:$0xff]
        %v662 = vadd.f32 %v661, %v653
        %663 = vst.msk [vmem:[#allocation2] sm:$0xff] %vm335, %v662
        %p664 = scmp.eq.s32.totalorder %s29, 7
        // Predicated region
        $region45: #{tpu_custom_call.1} parent=39 // pred_check
          %p665 = pneg %p664
        $region46: #{tpu_custom_call.1} parent=39 // pred_check_branch
          %667 = sbr.rel (%p665) target = $region48
        $region47: #{tpu_custom_call.1} parent=39 // pred_region
          %v668 = vld [vmem:[#allocation2] sm:$0xff]
          %v669 = vld [vmem:[%s4] sm:$0x1]
          %v671 = vlaneseq
          %v672 = vshrl.u32 %v671, 7
          %v673 = vsub.s32 0, %v672
          %v674 = vrot.slane %v669, %v673
          %v676 = vadd.f32 %v668, %v674
          %677 = vst.msk [vmem:[%s299] sm:$0xff] %vm335, %v676
        $region48: #{tpu_custom_call.1} parent=39 // pred_fallthru
          _
        %s678 = sand.u32 %s169, 1
        %s679 = scalar_lea.sflag [#allocation4], %s678
        %s680 = sand.u32 %s169, 1
        %s681 = smul.addr %s680, 8
        %s682 = scalar_lea.vmem [#allocation3], %s681
        %s683 = sand.u32 %s197, 1
        %s684 = scalar_lea.sflag [#allocation6], %s683
        %s685 = sand.u32 %s197, 1
        %s686 = smul.addr %s685, 8
        %s687 = scalar_lea.vmem [#allocation5], %s686
        // Predicated region
        $region49: #{tpu_custom_call.1} parent=39 // pred_check
          %p688 = pneg %p179
        $region50: #{tpu_custom_call.1} parent=39 // pred_check_branch
          %690 = sbr.rel (%p688) target = $region52
        $region51: #{tpu_custom_call.1} parent=39 // pred_region
          %s692 = ssub.s32 128, 128
          %693 = vsyncadd %s679, %s692
          %s694 = smul.addr %s28, 128
          %s695 = scalar_lea.hbm %s5, %s694
          %s697 = sshll.u32 %s682, 4
          %s698 = int_to_ptr.vmem [resolvable:$true] %s697
          %700 = dma.vmem_to_hbm [thread:$0]  %s698, 128, %s695, %s679
        $region52: #{tpu_custom_call.1} parent=39 // pred_fallthru
          _
        // Predicated region
        $region53: #{tpu_custom_call.1} parent=39 // pred_check
          %p701 = pneg %p207
        $region54: #{tpu_custom_call.1} parent=39 // pred_check_branch
          %703 = sbr.rel (%p701) target = $region56
        $region55: #{tpu_custom_call.1} parent=39 // pred_region
          %s705 = ssub.s32 128, 128
          %706 = vsyncadd %s684, %s705
          %s707 = smul.addr %s28, 8
          %s708 = sadd.s32 %s29, %s707
          %s709 = smul.addr %s708, 128
          %s710 = scalar_lea.hbm %s6, %s709
          %s712 = sshll.u32 %s687, 4
          %s713 = int_to_ptr.vmem [resolvable:$true] %s712
          %715 = dma.vmem_to_hbm [thread:$0]  %s713, 128, %s710, %s684
        $region56: #{tpu_custom_call.1} parent=39 // pred_fallthru
          _
      $region40: #{tpu_custom_call.1} parent=5 // pred_fallthru
        _
      %p716 = scmp.le.s32.totalorder 2, %s19
      // Predicated region
      $region57: #{tpu_custom_call.1} parent=5 // pred_check
        %p717 = pneg %p716
      $region58: #{tpu_custom_call.1} parent=5 // pred_check_branch
        %719 = sbr.rel (%p717) target = $region60
      $region59: #{tpu_custom_call.1} parent=5 // pred_region
        %s720 = ssub.s32 %s19, 2
        // Predicated region
        $region61: #{tpu_custom_call.1} parent=59 // pred_check
          %p721 = pneg %p185
        $region62: #{tpu_custom_call.1} parent=59 // pred_check_branch
          %723 = sbr.rel (%p721) target = $region64
        $region63: #{tpu_custom_call.1} parent=59 // pred_region
          %s724 = sand.u32 %s170, 1
          %s725 = scalar_lea.sflag [#allocation4], %s724
          %s726 = sand.u32 %s170, 1
          %s727 = smul.addr %s726, 8
          %s728 = scalar_lea.vmem [#allocation3], %s727
          %729 = dma.done %s725, 128
        $region64: #{tpu_custom_call.1} parent=59 // pred_fallthru
          _
        // Predicated region
        $region65: #{tpu_custom_call.1} parent=59 // pred_check
          %p730 = pneg %p213
        $region66: #{tpu_custom_call.1} parent=59 // pred_check_branch
          %732 = sbr.rel (%p730) target = $region68
        $region67: #{tpu_custom_call.1} parent=59 // pred_region
          %s733 = sand.u32 %s198, 1
          %s734 = scalar_lea.sflag [#allocation6], %s733
          %s735 = sand.u32 %s198, 1
          %s736 = smul.addr %s735, 8
          %s737 = scalar_lea.vmem [#allocation5], %s736
          %738 = dma.done %s734, 128
        $region68: #{tpu_custom_call.1} parent=59 // pred_fallthru
          _
      $region60: #{tpu_custom_call.1} parent=5 // pred_fallthru
        _
    $region6: #{tpu_custom_call.1} parent=1 // loop_footer
      %s23 = sadd.s32 1, %s19
    $region7: #{tpu_custom_call.1} parent=1 // loop_footer_branch
      %18 = sbr.rel target = $region3
    $region8: #{tpu_custom_call.1} parent=1 // loop_exit
      _
    %739 = vsyncpa [#allocation4], 1
    %s740 = scalar_lea.sflag [#allocation4], 1
    %741 = vsyncpa %s740, 1
    %742 = vsyncpa [#allocation6], 1
    %s743 = scalar_lea.sflag [#allocation6], 1
    %744 = vsyncpa %s743, 1

</llo_original>
